<compile_context>
chip_gen: v6e
topology: v6e:2x2x1
jax: 0.10.0
libtpu: 0.0.40
codegen_flags: <defaults>
</compile_context>

<pallas_src>
import jax
import jax.numpy as jnp
from jax.experimental import pallas as pl
from jax.experimental.pallas import tpu as pltpu


def _round_up(x, m):
    return ((x + m - 1) // m) * m


def _choose_tile_e(n_candidates, max_tile=2048, min_steps=8):
    """Lane-dense candidate tile width (multiple of 128) giving at least `min_steps`
    grid steps along the candidate axis (>= 4 per v7x TensorCore), capped at max_tile."""
    tile = (n_candidates // (min_steps * 128)) * 128
    return max(128, min(max_tile, tile))


def _vmem_params(vmem_est):
    """Generation-aware scoped-VMEM override.

    Triggers below v5e's 16 MiB scoped default; caps at physical VMEM minus ~12 MiB of
    headroom for Mosaic internal scratch (≈52 MiB usable on v7x, ≈116 MiB on v5e/v6e).
    """
    need = int(vmem_est * 1.25) + (2 << 20)
    if need <= (12 << 20):
        return {}
    try:
        phys = int(pltpu.get_tpu_info().vmem_capacity_bytes)
    except Exception:
        phys = 64 << 20            # conservative fallback: v7x per-core VMEM
    cap = max(phys - (12 << 20), 16 << 20)
    return {"vmem_limit_bytes": min(need, cap)}


# ---------------------------------------------------------------------------
# Fused Pallas kernel: scores = (head * rel) @ cdd.T
#   - combine on the VPU in f32 (v5e has no bf16 VALU), cast to bf16 for the MXU
#   - f32 accumulation via preferred_element_type
#   - candidate table streamed as pre-blocked contiguous (rank, tile_e) bf16 tiles
# ---------------------------------------------------------------------------
def _score_kernel(h_ref, r_ref, c_ref, o_ref):
    q = (h_ref[...] * r_ref[...]).astype(jnp.bfloat16)           # (tq, R) bf16
    o_ref[...] = jnp.dot(q, c_ref[0], preferred_element_type=jnp.float32)


def pallas_score(head_e, rel_e, cdd_blk, *, tq, tile_e):
    """scores = (head*rel) @ cdd.T, cdd pre-blocked as (n_tiles, rank, tile_e) bf16."""
    Qp, R = head_e.shape
    n_tiles, R2, te = cdd_blk.shape
    assert R2 == R and te == tile_e and Qp % tq == 0
    Ep = n_tiles * tile_e
    # candidate axis innermost -> h/r blocks are revisited (no re-DMA) across it
    grid = (Qp // tq, n_tiles)

    # double-buffered candidate + output tiles, plus (double-buffered) resident h/r blocks
    vmem_est = 2 * (R * tile_e * 2 + tq * tile_e * 4 + 2 * tq * R * 4)
    cparams = dict(dimension_semantics=("parallel", "parallel"))
    cparams.update(_vmem_params(vmem_est))

    # TODO(synk): single-buffer the grid-invariant h/r operands (pipeline_mode=pl.Buffered(1))
    # once Qp/rank scale enough for VMEM pressure; negligible at rank=64.
    return pl.pallas_call(
        _score_kernel,
        out_shape=jax.ShapeDtypeStruct((Qp, Ep), jnp.float32),
        grid_spec=pltpu.PrefetchScalarGridSpec(
            num_scalar_prefetch=0,
            grid=grid,
            in_specs=[
                pl.BlockSpec((tq, R), lambda i, j: (i, 0)),            # grid-invariant head rows
                pl.BlockSpec((tq, R), lambda i, j: (i, 0)),            # grid-invariant rel rows
                pl.BlockSpec((1, R, tile_e), lambda i, j: (j, 0, 0)),  # contiguous candidate tile
            ],
            out_specs=pl.BlockSpec((tq, tile_e), lambda i, j: (i, j)),
        ),
        compiler_params=pltpu.CompilerParams(**cparams),
    )(head_e, rel_e, cdd_blk)


# ---------------------------------------------------------------------------
# Concrete TKGModel (JAX glue around the Pallas hot path)
# ---------------------------------------------------------------------------
class SimpleTKGModel:
    """Minimal concrete TKGModel: qry = ent[h] * rel[r]; score = qry @ ent.T."""

    def __init__(self, sizes, rank, dropout=0.0, key=jax.random.PRNGKey(0)):
        self.sizes = sizes          # (n_entities, n_relations)  (relations not doubled)
        self.rank = rank
        self.dropout = dropout      # TODO(synk): dropout unused in this deterministic/inference forward
        k1, k2 = jax.random.split(key)
        # nn.Embedding default init ~ N(0, 1); relations are doubled (inverse relations)
        self.ent_emb = jax.random.normal(k1, (sizes[0], rank), jnp.float32)
        self.rel_emb = jax.random.normal(k2, (sizes[1] * 2, rank), jnp.float32)

        # Cache the bf16 candidate table ONCE (amortized across forwards; re-derive only if
        # ent_emb changes).  Pre-block to (n_tiles, rank, tile_e) so every streamed tile is one
        # fully contiguous DMA; pad entities to a multiple of tile_e (zero columns).
        E = sizes[0]
        self.tile_e = _choose_tile_e(E)
        Ep = _round_up(E, self.tile_e)
        cdd_t = jnp.transpose(self.ent_emb).astype(jnp.bfloat16)      # (rank, E)
        if Ep != E:
            cdd_t = jnp.pad(cdd_t, ((0, 0), (0, Ep - E)))
        self.cdd_blk = jnp.transpose(
            cdd_t.reshape(rank, Ep // self.tile_e, self.tile_e), (1, 0, 2)
        )                                                              # (n_tiles, rank, tile_e) bf16

    # --- abstract methods, made concrete -----------------------------------
    def get_embeddings(self, snapshots, auxiliaries):
        ent_embs = {"ent": self.ent_emb}
        rel_embs = {"rel": self.rel_emb}
        extra_embs = {}
        return ent_embs, rel_embs, extra_embs

    def get_queries(self, queries, ent_embs, rel_embs, extra_embs):
        heads = queries[:, 0]
        rels = queries[:, 1]
        tails = queries[:, 2]
        all_anws = tails                                    # (num_query,)
        # TODO(synk): for very large Q the gathers could move in-kernel via
        # PrefetchScalarGridSpec + pl.Element row blocks; negligible at small Q.
        head_e = jnp.take(ent_embs["ent"], heads, axis=0)   # (Q, rank) f32
        rel_e = jnp.take(rel_embs["rel"], rels, axis=0)     # (Q, rank) f32
        qry_embs = {"head": head_e, "rel": rel_e}
        cdd_embs = {"cdd": ent_embs["ent"], "cdd_blk": self.cdd_blk}
        return all_anws, qry_embs, cdd_embs

    def score(self, qry_embs, cdd_embs):
        head_e = qry_embs["head"]
        rel_e = qry_embs["rel"]
        Q = head_e.shape[0]
        # Minimal query padding (bf16 sublane pack = 16 rows); second grid axis over query
        # tiles only when the batch grows, keeping per-step VMEM bounded on v7x.
        if Q <= 256:
            tq = _round_up(max(Q, 1), 16)
            Qp = tq
        else:
            tq = 256
            Qp = _round_up(Q, tq)
        if Qp != Q:
            pad = ((0, Qp - Q), (0, 0))
            head_e = jnp.pad(head_e, pad)
            rel_e = jnp.pad(rel_e, pad)
        scores = pallas_score(head_e, rel_e, cdd_embs["cdd_blk"],
                              tq=tq, tile_e=self.tile_e)
        E = cdd_embs["cdd"].shape[0]
        return scores[:Q, :E]

    # --- forward: identical control flow to the abstract base class --------
    def forward(self, snapshots, queries, auxiliaries):
        ent_embs, rel_embs, extra_embs = self.get_embeddings(snapshots, auxiliaries)
        all_anws, qry_embs, cdd_embs = self.get_queries(
            queries, ent_embs, rel_embs, extra_embs)
        scores = self.score(qry_embs, cdd_embs)
        return (ent_embs, rel_embs, extra_embs, qry_embs, cdd_embs, all_anws, scores)


# ---------------------------------------------------------------------------
if __name__ == "__main__":
    key = jax.random.PRNGKey(0)
    n_entities, n_relations = 1024, 4
    rank = 64
    num_query = 8

    model = SimpleTKGModel((n_entities, n_relations), rank, dropout=0.0, key=key)

    # deterministic synthetic query triples (head, relation, tail)
    kq = jax.random.split(key, 3)
    heads = jax.random.randint(kq[0], (num_query,), 0, n_entities)
    rels = jax.random.randint(kq[1], (num_query,), 0, n_relations * 2)
    tails = jax.random.randint(kq[2], (num_query,), 0, n_entities)
    queries = jnp.stack([heads, rels, tails], axis=1)       # (Q, 3) int32

    snapshots = []       # unused by this concrete encoder
    auxiliaries = {}     # unused by this concrete encoder

    (ent_embs, rel_embs, extra_embs,
     qry_embs, cdd_embs, all_anws, scores) = model.forward(snapshots, queries, auxiliaries)
    scores = jax.block_until_ready(scores)

    # reference check in plain JAX at the same (bf16 operand / f32 accumulate) precision
    qry_bf = (qry_embs["head"] * qry_embs["rel"]).astype(jnp.bfloat16)
    cdd_bf = jnp.transpose(model.ent_emb).astype(jnp.bfloat16)         # (rank, E)
    scores_ref = jnp.dot(qry_bf.astype(jnp.float32), cdd_bf.astype(jnp.float32))

    assert scores.shape == (num_query, n_entities)
    assert all_anws.shape == (num_query,)
    assert jnp.allclose(scores, scores_ref, atol=1e-2, rtol=1e-2)

    print("KERNEL_OK")
</pallas_src>

<mosaic_0001>
module attributes {stable_mosaic.version = 11 : i64} {
  func.func @_score_kernel(%arg0: i32, %arg1: i32, %arg2: memref<16x64xf32, #tpu.memory_space<vmem>>, %arg3: memref<16x64xf32, #tpu.memory_space<vmem>>, %arg4: memref<1x64x128xbf16, #tpu.memory_space<vmem>>, %arg5: memref<16x128xf32, #tpu.memory_space<vmem>>) attributes {dimension_semantics = [#tpu.dimension_semantics<parallel>, #tpu.dimension_semantics<parallel>], iteration_bounds = array<i64: 1, 8>, scalar_prefetch = 0 : i64, scratch_operands = 0 : i64, tpu.core_type = #tpu.core_type<tc>, window_params = [{transform_indices = @transform_0, window_bounds = array<i64: 16, 64>}, {transform_indices = @transform_1, window_bounds = array<i64: 16, 64>}, {transform_indices = @transform_2, window_bounds = array<i64: 1, 64, 128>}, {transform_indices = @transform_3, window_bounds = array<i64: 16, 128>}]} {
    %c0 = arith.constant 0 : index
    %c0_0 = arith.constant 0 : index
    %0 = vector.load %arg2[%c0, %c0_0] : memref<16x64xf32, #tpu.memory_space<vmem>>, vector<16x64xf32>
    %c0_1 = arith.constant 0 : index
    %c0_2 = arith.constant 0 : index
    %1 = vector.load %arg3[%c0_1, %c0_2] : memref<16x64xf32, #tpu.memory_space<vmem>>, vector<16x64xf32>
    %2 = arith.mulf %0, %1 : vector<16x64xf32>
    %3 = arith.truncf %2 : vector<16x64xf32> to vector<16x64xbf16>
    %c0_3 = arith.constant 0 : index
    %c0_4 = arith.constant 0 : index
    %c0_5 = arith.constant 0 : index
    %4 = vector.load %arg4[%c0_3, %c0_4, %c0_5] : memref<1x64x128xbf16, #tpu.memory_space<vmem>>, vector<1x64x128xbf16>
    %5 = vector.shape_cast %4 : vector<1x64x128xbf16> to vector<64x128xbf16>
    %cst = arith.constant dense<0.000000e+00> : vector<16x128xf32>
    %6 = tpu.matmul %3, %5, %cst {dimension_numbers = #tpu.dot_dimension_numbers<[1], [0], [0], [1], [0, 0, 1, 1], [], []>} : vector<16x64xbf16>, vector<64x128xbf16>, vector<16x128xf32> -> vector<16x128xf32>
    %c0_6 = arith.constant 0 : index
    %c0_7 = arith.constant 0 : index
    %7 = vector.load %arg5[%c0_6, %c0_7] : memref<16x128xf32, #tpu.memory_space<vmem>>, vector<16x128xf32>
    tpu.vector_store %arg5[%c0_6, %c0_7], %6 {strides = array<i32>} : memref<16x128xf32, #tpu.memory_space<vmem>>, vector<16x128xf32>,
    return
  }
  func.func @transform_0(%arg0: i32, %arg1: i32) -> (i32, i32) {
    %c0_i32 = arith.constant 0 : i32
    %c0_i32_0 = arith.constant 0 : i32
    return %arg0, %c0_i32 : i32, i32
  }
  func.func @transform_1(%arg0: i32, %arg1: i32) -> (i32, i32) {
    %c0_i32 = arith.constant 0 : i32
    %c0_i32_0 = arith.constant 0 : i32
    return %arg0, %c0_i32 : i32, i32
  }
  func.func @transform_2(%arg0: i32, %arg1: i32) -> (i32, i32, i32) {
    %c0_i32 = arith.constant 0 : i32
    %c0_i32_0 = arith.constant 0 : i32
    %c0_i32_1 = arith.constant 0 : i32
    return %arg1, %c0_i32, %c0_i32_0 : i32, i32, i32
  }
  func.func @transform_3(%arg0: i32, %arg1: i32) -> (i32, i32) {
    %c0_i32 = arith.constant 0 : i32
    return %arg0, %arg1 : i32, i32
  }
}

</mosaic_0001>

<llo_original>
// kernel: tpu_custom_call.1
$region0: #{tpu_custom_call.1}
  #allocation0 [shape = 'u32[]', space=smem, size = 0x4, offset = 0x4, fixed_abs, tag = 'smem constant byte address 0x4 - core index']
  #allocation1 [shape = 'u32[144,128]{1,0:T(1,128)}', space=vmem, size = 0x12000, scoped, tag = 'internal scratch']
  %s0 = inlined_call_operand.hbm [shape: f32[16,64], index: 0, kind: input, shape index: {}]
  %s1 = inlined_call_operand.hbm [shape: f32[16,64], index: 1, kind: input, shape index: {}]
  %s2 = inlined_call_operand.hbm [shape: bf16[8,64,128], index: 2, kind: input, shape index: {}]
  %s3 = inlined_call_operand.hbm [shape: f32[16,1024], index: 3, kind: output, shape index: {}]
  %s4 = sld [smem:[#allocation0]]
  $region57: #{tpu_custom_call.1} parent=0
    _
  %s6 = ssub.s32 1, %s4
  %s7 = scalar_select 0, %s6, %s4
  $region1: #{tpu_custom_call.1} parent=0
    #allocation2 [shape = 'u8[8192]{0}', space=vmem, size = 0x2000, scoped, tag = 'input window, operand 0, single buffered']
    #allocation3 [shape = 's32[2]{0}', space=sflag, size = 0x8, scoped, tag = 'scoped memory for tpu_custom_call.1']
    #allocation4 [shape = 's32[2]{0}', space=sflag, size = 0x8, scoped, tag = 'scoped memory for tpu_custom_call.1']
    #allocation5 [shape = 'u8[8192]{0}', space=vmem, size = 0x2000, scoped, tag = 'input window, operand 1, single buffered']
    #allocation6 [shape = 's32[1]{0}', space=sflag, size = 0x4, scoped, tag = 'scoped memory for tpu_custom_call.1']
    #allocation7 [shape = 'u8[32768]{0}', space=vmem, size = 0x8000, scoped, tag = 'input window, operand 2']
    #allocation8 [shape = 'u8[16384]{0}', space=vmem, size = 0x4000, scoped, tag = 'output window, operand 0']
    %8 = vsyncpa [#allocation3], 0
    %9 = vsyncpa [#allocation6], 0
    %10 = vsyncpa [#allocation4], 0
    %s11 = scalar_lea.sflag [#allocation4], 1
    %12 = vsyncpa %s11, 0
    loop: start=0, step=1, limit=10
    $region2: #{tpu_custom_call.1} parent=1 // loop_pre_header
      _
    $region3: #{tpu_custom_call.1} parent=1 // loop_header
      %s14 = sphi 0, %s18
      %p15 = scmp.ge.s32.totalorder %s14, 10
      %s21 = sphi 0, %s33
      %s22 = sphi 0, %s29
      %s23 = sphi 0, %s21
      %s24 = sphi 0, %s22
      %s25 = sphi 0, %s23
      %s26 = sphi 0, %s24
      %s36 = sphi 0, %s38
      %s39 = sphi 0, %s36
      %s40 = sphi 0, %s39
      %s56 = sphi 0, %s40
      %s62 = sphi 0, %s64
      %s65 = sphi 0, %s62
      %s66 = sphi 0, %s65
      %s82 = sphi 0, %s66
      %s88 = sphi 0, %s90
      %s91 = sphi 0, %s88
      %s92 = sphi 0, %s91
      %s108 = sphi 0, %s92
      %s116 = sphi 0, %s118
      %s119 = sphi 0, %s116
      %s120 = sphi 0, %s119
      %s136 = sphi 0, %s120
    $region4: #{tpu_custom_call.1} parent=1 // loop_header_branch
      %17 = sbr.rel (%p15) target = $region8
    $region5: #{tpu_custom_call.1} parent=1 // loop_body
      %s19 = ssub.s32 %s14, 1
      %s20 = ssub.s32 %s14, 2
      %s27 = sadd.s32 1, %s22
      %p28 = scmp.ge.s32.totalorder %s27, 8
      %s29 = scalar_select %p28, 0, %s27
      %s30 = sadd.s32 1, %s21
      %s31 = scalar_select %p28, %s30, %s21
      %p32 = scmp.ge.s32.totalorder %s31, 1
      %s33 = scalar_select %p32, 0, %s31
      %s34 = ssub.s32 %s21, %s33
      %p35 = scmp.eq.s32.totalorder %s34, 0
      %s37 = sadd.s32 %s36, 1
      %s38 = scalar_select %p35, %s36, %s37
      %p41 = pneg %p35
      %p42 = scmp.eq.s32.totalorder %s14, 7
      %p43 = por %p41, %p42
      %p44 = scmp.ne.s32.totalorder %s36, %s39
      %p45 = scmp.eq.s32.totalorder %s14, 0
      %p46 = por %p44, %p45
      %p47 = scmp.ne.s32.totalorder %s36, %s39
      %p48 = scmp.eq.s32.totalorder %s19, 7
      %p49 = por %p47, %p48
      %p50 = scmp.ne.s32.totalorder %s39, %s40
      %p51 = scmp.eq.s32.totalorder %s19, 0
      %p52 = por %p50, %p51
      %p53 = scmp.ne.s32.totalorder %s39, %s40
      %p54 = scmp.eq.s32.totalorder %s20, 7
      %p55 = por %p53, %p54
      %p57 = scmp.ne.s32.totalorder %s40, %s56
      %p58 = scmp.eq.s32.totalorder %s20, 0
      %p59 = por %p57, %p58
      %s60 = ssub.s32 %s21, %s33
      %p61 = scmp.eq.s32.totalorder %s60, 0
      %s63 = sadd.s32 %s62, 1
      %s64 = scalar_select %p61, %s62, %s63
      %p67 = pneg %p61
      %p68 = scmp.eq.s32.totalorder %s14, 7
      %p69 = por %p67, %p68
      %p70 = scmp.ne.s32.totalorder %s62, %s65
      %p71 = scmp.eq.s32.totalorder %s14, 0
      %p72 = por %p70, %p71
      %p73 = scmp.ne.s32.totalorder %s62, %s65
      %p74 = scmp.eq.s32.totalorder %s19, 7
      %p75 = por %p73, %p74
      %p76 = scmp.ne.s32.totalorder %s65, %s66
      %p77 = scmp.eq.s32.totalorder %s19, 0
      %p78 = por %p76, %p77
      %p79 = scmp.ne.s32.totalorder %s65, %s66
      %p80 = scmp.eq.s32.totalorder %s20, 7
      %p81 = por %p79, %p80
      %p83 = scmp.ne.s32.totalorder %s66, %s82
      %p84 = scmp.eq.s32.totalorder %s20, 0
      %p85 = por %p83, %p84
      %s86 = ssub.s32 %s22, %s29
      %p87 = scmp.eq.s32.totalorder %s86, 0
      %s89 = sadd.s32 %s88, 1
      %s90 = scalar_select %p87, %s88, %s89
      %p93 = pneg %p87
      %p94 = scmp.eq.s32.totalorder %s14, 7
      %p95 = por %p93, %p94
      %p96 = scmp.ne.s32.totalorder %s88, %s91
      %p97 = scmp.eq.s32.totalorder %s14, 0
      %p98 = por %p96, %p97
      %p99 = scmp.ne.s32.totalorder %s88, %s91
      %p100 = scmp.eq.s32.totalorder %s19, 7
      %p101 = por %p99, %p100
      %p102 = scmp.ne.s32.totalorder %s91, %s92
      %p103 = scmp.eq.s32.totalorder %s19, 0
      %p104 = por %p102, %p103
      %p105 = scmp.ne.s32.totalorder %s91, %s92
      %p106 = scmp.eq.s32.totalorder %s20, 7
      %p107 = por %p105, %p106
      %p109 = scmp.ne.s32.totalorder %s92, %s108
      %p110 = scmp.eq.s32.totalorder %s20, 0
      %p111 = por %p109, %p110
      %s112 = ssub.s32 %s21, %s33
      %s113 = ssub.s32 %s22, %s29
      %s114 = sor.u32 %s112, %s113
      %p115 = scmp.eq.s32.totalorder %s114, 0
      %s117 = sadd.s32 %s116, 1
      %s118 = scalar_select %p115, %s116, %s117
      %p121 = pneg %p115
      %p122 = scmp.eq.s32.totalorder %s14, 7
      %p123 = por %p121, %p122
      %p124 = scmp.ne.s32.totalorder %s116, %s119
      %p125 = scmp.eq.s32.totalorder %s14, 0
      %p126 = por %p124, %p125
      %p127 = scmp.ne.s32.totalorder %s116, %s119
      %p128 = scmp.eq.s32.totalorder %s19, 7
      %p129 = por %p127, %p128
      %p130 = scmp.ne.s32.totalorder %s119, %s120
      %p131 = scmp.eq.s32.totalorder %s19, 0
      %p132 = por %p130, %p131
      %p133 = scmp.ne.s32.totalorder %s119, %s120
      %p134 = scmp.eq.s32.totalorder %s20, 7
      %p135 = por %p133, %p134
      %p137 = scmp.ne.s32.totalorder %s120, %s136
      %p138 = scmp.eq.s32.totalorder %s20, 0
      %p139 = por %p137, %p138
      %p140 = scmp.le.s32.totalorder 1, %s14
      %p141 = scmp.lt.s32.totalorder %s14, 9
      %p142 = pnand %p140, %p141
      %p143 = pneg %p142
      // Predicated region
      $region9: #{tpu_custom_call.1} parent=5 // pred_check
        _
      $region10: #{tpu_custom_call.1} parent=5 // pred_check_branch
        %145 = sbr.rel (%p142) target = $region12
      $region11: #{tpu_custom_call.1} parent=5 // pred_region
        %s146 = ssub.s32 %s14, 1
        // Predicated region
        $region13: #{tpu_custom_call.1} parent=11 // pred_check
          %p147 = pneg %p52
        $region14: #{tpu_custom_call.1} parent=11 // pred_check_branch
          %149 = sbr.rel (%p147) target = $region16
        $region15: #{tpu_custom_call.1} parent=11 // pred_region
          %s150 = smul.u32 2, %s23
          %s152 = ssub.s32 256, 256
          %153 = vsyncadd [#allocation3], %s152
          %s154 = smul.addr %s150, 128
          %s155 = scalar_lea.hbm %s0, %s154
          %s156 = sshll.u32 [#allocation2], 4
          %s157 = int_to_ptr.vmem [resolvable:$true] %s156
          %162 = dma.hbm_to_vmem [thread:$0]  %s155, 256, %s157, [#allocation3], 128, 128, 8
        $region16: #{tpu_custom_call.1} parent=11 // pred_fallthru
          _
        // Predicated region
        $region17: #{tpu_custom_call.1} parent=11 // pred_check
          %p163 = pneg %p78
        $region18: #{tpu_custom_call.1} parent=11 // pred_check_branch
          %165 = sbr.rel (%p163) target = $region20
        $region19: #{tpu_custom_call.1} parent=11 // pred_region
          %s166 = smul.u32 2, %s23
          %s168 = ssub.s32 256, 256
          %169 = vsyncadd [#allocation6], %s168
          %s170 = smul.addr %s166, 128
          %s171 = scalar_lea.hbm %s1, %s170
          %s172 = sshll.u32 [#allocation5], 4
          %s173 = int_to_ptr.vmem [resolvable:$true] %s172
          %178 = dma.hbm_to_vmem [thread:$0]  %s171, 256, %s173, [#allocation6], 128, 128, 8
        $region20: #{tpu_custom_call.1} parent=11 // pred_fallthru
          _
      $region12: #{tpu_custom_call.1} parent=5 // pred_fallthru
        _
      %p179 = scmp.lt.s32.totalorder %s14, 8
      // Predicated region
      $region21: #{tpu_custom_call.1} parent=5 // pred_check
        %p180 = pneg %p179
      $region22: #{tpu_custom_call.1} parent=5 // pred_check_branch
        %182 = sbr.rel (%p180) target = $region24
      $region23: #{tpu_custom_call.1} parent=5 // pred_region
        // Predicated region
        $region25: #{tpu_custom_call.1} parent=23 // pred_check
          %p183 = pneg %p98
        $region26: #{tpu_custom_call.1} parent=23 // pred_check_branch
          %185 = sbr.rel (%p183) target = $region28
        $region27: #{tpu_custom_call.1} parent=23 // pred_region
          %s186 = sand.u32 %s14, 1
          %s187 = scalar_lea.sflag [#allocation3], %s186
          %s188 = sand.u32 %s88, 1
          %s189 = smul.addr %s188, 32
          %s190 = scalar_lea.vmem [#allocation7], %s189
          %s192 = ssub.s32 512, 512
          %193 = vsyncadd %s187, %s192
          %s194 = smul.addr %s22, 8
          %s195 = smul.addr %s194, 64
          %s196 = scalar_lea.hbm %s2, %s195
          %s197 = sshll.u32 %s190, 4
          %s198 = int_to_ptr.vmem [resolvable:$true] %s197
          %203 = dma.hbm_to_vmem [thread:$0]  %s196, 512, %s198, %s187, 64, 64, 4
        $region28: #{tpu_custom_call.1} parent=23 // pred_fallthru
          _
      $region24: #{tpu_custom_call.1} parent=5 // pred_fallthru
        _
      %p204 = scmp.le.s32.totalorder 1, %s14
      %p205 = scmp.lt.s32.totalorder %s14, 9
      %p206 = pnand %p204, %p205
      %p207 = pneg %p206
      // Predicated region
      $region29: #{tpu_custom_call.1} parent=5 // pred_check
        _
      $region30: #{tpu_custom_call.1} parent=5 // pred_check_branch
        %209 = sbr.rel (%p206) target = $region32
      $region31: #{tpu_custom_call.1} parent=5 // pred_region
        %s210 = ssub.s32 %s14, 1
        // Predicated region
        $region33: #{tpu_custom_call.1} parent=31 // pred_check
          %p211 = pneg %p52
        $region34: #{tpu_custom_call.1} parent=31 // pred_check_branch
          %213 = sbr.rel (%p211) target = $region36
        $region35: #{tpu_custom_call.1} parent=31 // pred_region
          %214 = dma.done [#allocation3], 256
        $region36: #{tpu_custom_call.1} parent=31 // pred_fallthru
          _
        // Predicated region
        $region37: #{tpu_custom_call.1} parent=31 // pred_check
          %p215 = pneg %p78
        $region38: #{tpu_custom_call.1} parent=31 // pred_check_branch
          %217 = sbr.rel (%p215) target = $region40
        $region39: #{tpu_custom_call.1} parent=31 // pred_region
          %218 = dma.done [#allocation6], 256
        $region40: #{tpu_custom_call.1} parent=31 // pred_fallthru
          _
        %s219 = sand.u32 %s19, 1
        %s220 = scalar_lea.sflag [#allocation3], %s219
        %s221 = sand.u32 %s91, 1
        %s222 = smul.addr %s221, 32
        %s223 = scalar_lea.vmem [#allocation7], %s222
        // Predicated region
        $region41: #{tpu_custom_call.1} parent=31 // pred_check
          %p224 = pneg %p104
        $region42: #{tpu_custom_call.1} parent=31 // pred_check_branch
          %226 = sbr.rel (%p224) target = $region44
        $region43: #{tpu_custom_call.1} parent=31 // pred_region
          %227 = dma.done %s220, 512
        $region44: #{tpu_custom_call.1} parent=31 // pred_fallthru
          _
        %p228 = pneg %p52
        %p229 = pneg %p49
        %p230 = pneg %p78
        %p231 = pneg %p75
        %s232 = sand.u32 %s19, 1
        %s233 = scalar_lea.sflag [#allocation3], %s232
        %s234 = sand.u32 %s91, 1
        %s235 = smul.addr %s234, 32
        %s236 = scalar_lea.vmem [#allocation7], %s235
        %p237 = pneg %p104
        %p238 = pneg %p101
        %p239 = pneg %p132
        %p240 = pneg %p129
        %s241 = sand.u32 %s119, 1
        %s242 = scalar_lea.sflag [#allocation4], %s241
        %s243 = sand.u32 %s119, 1
        %s244 = smul.addr %s243, 16
        %s245 = scalar_lea.vmem [#allocation8], %s244
        %s246 = smul.u32 2, %s23
        %s247 = smul.u32 2, %s23
        %s248 = smul.u32 2, %s23
        %v250 = vld [vmem:[#allocation2] sm:$0xff]
        %v251 = vld [vmem:[#allocation2 + $0x8] sm:$0xff]
        %v252 = vld [vmem:[#allocation5] sm:$0xff]
        %v253 = vld [vmem:[#allocation5 + $0x8] sm:$0xff]
        %v254 = vmul.f32 %v250, %v252
        %v255 = vmul.f32 %v251, %v253
        %v256 = vpack.c.bf16 %v255, %v254
        %v257 = vld [vmem:[%s223] sm:$0xf]
        %v258 = vld [vmem:[%s223 + $0x4] sm:$0xf]
        %v259 = vld [vmem:[%s223 + $0x8] sm:$0xf]
        %v260 = vld [vmem:[%s223 + $0xc] sm:$0xf]
        %v261 = vld [vmem:[%s223 + $0x10] sm:$0xf]
        %v262 = vld [vmem:[%s223 + $0x14] sm:$0xf]
        %v263 = vld [vmem:[%s223 + $0x18] sm:$0xf]
        %v264 = vld [vmem:[%s223 + $0x1c] sm:$0xf]
        %v273 = vunpack.c.l.b16 %v257
        %v274 = vunpack.c.l.b16 %v258
        %v275 = vunpack.c.l.b16 %v259
        %v276 = vunpack.c.l.b16 %v260
        %v277 = vunpack.c.l.b16 %v261
        %v278 = vunpack.c.l.b16 %v262
        %v279 = vunpack.c.l.b16 %v263
        %v280 = vunpack.c.l.b16 %v264
        %v281 = vpack.c.b16 %v274, %v273
        %v282 = vpack.c.b16 %v276, %v275
        %v283 = vpack.c.b16 %v278, %v277
        %v284 = vpack.c.b16 %v280, %v279
        %vm289 = vcmask 523264
        %v291 = vsel %vm289, %v256, 0
        %293 = vmatprep.subr.bf16.mxu0 0
        %294 = vmatpush1.bf16.msra.mxu0 0
        %295 = vmatprep.subr.bf16.mxu0 0
        %296 = vmatpush1.bf16.msra.mxu0 0
        %297 = vmatprep.subr.bf16.mxu0 0
        %298 = vmatpush1.bf16.msra.mxu0 0
        %299 = vmatprep.subr.bf16.mxu0 0
        %300 = vmatpush1.bf16.msra.mxu0 0
        %301 = vmatprep.subr.bf16.mxu0 0
        %302 = vmatpush1.bf16.msra.mxu0 %v284
        %303 = vmatprep.subr.bf16.mxu0 0
        %304 = vmatpush1.bf16.msra.mxu0 %v283
        %305 = vmatprep.subr.bf16.mxu0 0
        %306 = vmatpush1.bf16.msra.mxu0 %v282
        %307 = vmatprep.subr.bf16.mxu0 0
        %308 = vmatpush1.bf16.msra.mxu0 %v281
        %309 = vmatprep.subr.bf16.mxu0 0
        %310 = vmatpush2.bf16.msra.mxu0 0
        %311 = vmatprep.subr.bf16.mxu0 0
        %312 = vmatpush2.bf16.msra.mxu0 0
        %313 = vmatprep.subr.bf16.mxu0 0
        %314 = vmatpush2.bf16.msra.mxu0 0
        %315 = vmatprep.subr.bf16.mxu0 0
        %316 = vmatpush2.bf16.msra.mxu0 0
        %317 = vmatprep.subr.bf16.mxu0 0
        %318 = vmatpush2.bf16.msra.mxu0 0
        %319 = vmatprep.subr.bf16.mxu0 0
        %320 = vmatpush2.bf16.msra.mxu0 0
        %321 = vmatprep.subr.bf16.mxu0 0
        %322 = vmatpush2.bf16.msra.mxu0 0
        %323 = vmatprep.subr.bf16.mxu0 0
        %324 = vmatpush2.bf16.msra.mxu0 0
        %325 = vmatprep.mubr.bf16.mxu0 0
        %326 = vmatmul.mubr.bf16.gmra.mxu0 %v291
        %v327 = vpop.f32.mrf.mxu0
        %v328 = vadd.f32 0.0, %v327
        %v329 = vpop.f32.mrf.mxu0
        %v330 = vpop.f32.mrf.mxu0
        %v331 = vadd.f32 0.0, %v330
        %v332 = vpop.f32.mrf.mxu0
        %333 = vdwg.mxu0
        %334 = vst [vmem:[%s245] sm:$0xff] %v328
        %335 = vst [vmem:[%s245 + $0x8] sm:$0xff] %v331
        %s336 = sand.u32 %s119, 1
        %s337 = scalar_lea.sflag [#allocation4], %s336
        %s338 = sand.u32 %s119, 1
        %s339 = smul.addr %s338, 16
        %s340 = scalar_lea.vmem [#allocation8], %s339
        // Predicated region
        $region45: #{tpu_custom_call.1} parent=31 // pred_check
          %p341 = pneg %p129
        $region46: #{tpu_custom_call.1} parent=31 // pred_check_branch
          %343 = sbr.rel (%p341) target = $region48
        $region47: #{tpu_custom_call.1} parent=31 // pred_region
          %s344 = smul.u32 2, %s23
          %s346 = ssub.s32 256, 256
          %347 = vsyncadd %s337, %s346
          %s348 = smul.addr %s344, 8
          %s349 = sadd.s32 %s24, %s348
          %s350 = smul.addr %s349, 128
          %s351 = scalar_lea.hbm %s3, %s350
          %s352 = sshll.u32 %s340, 4
          %s353 = int_to_ptr.vmem [resolvable:$true] %s352
          %358 = dma.vmem_to_hbm [thread:$0]  %s353, 256, %s351, %s337, 128, 1024, 8
        $region48: #{tpu_custom_call.1} parent=31 // pred_fallthru
          _
      $region32: #{tpu_custom_call.1} parent=5 // pred_fallthru
        _
      %p359 = scmp.le.s32.totalorder 2, %s14
      // Predicated region
      $region49: #{tpu_custom_call.1} parent=5 // pred_check
        %p360 = pneg %p359
      $region50: #{tpu_custom_call.1} parent=5 // pred_check_branch
        %362 = sbr.rel (%p360) target = $region52
      $region51: #{tpu_custom_call.1} parent=5 // pred_region
        %s363 = ssub.s32 %s14, 2
        // Predicated region
        $region53: #{tpu_custom_call.1} parent=51 // pred_check
          %p364 = pneg %p135
        $region54: #{tpu_custom_call.1} parent=51 // pred_check_branch
          %366 = sbr.rel (%p364) target = $region56
        $region55: #{tpu_custom_call.1} parent=51 // pred_region
          %s367 = sand.u32 %s120, 1
          %s368 = scalar_lea.sflag [#allocation4], %s367
          %s369 = sand.u32 %s120, 1
          %s370 = smul.addr %s369, 16
          %s371 = scalar_lea.vmem [#allocation8], %s370
          %372 = dma.done %s368, 256
        $region56: #{tpu_custom_call.1} parent=51 // pred_fallthru
          _
      $region52: #{tpu_custom_call.1} parent=5 // pred_fallthru
        _
    $region6: #{tpu_custom_call.1} parent=1 // loop_footer
      %s18 = sadd.s32 1, %s14
    $region7: #{tpu_custom_call.1} parent=1 // loop_footer_branch
      %13 = sbr.rel target = $region3
    $region8: #{tpu_custom_call.1} parent=1 // loop_exit
      _
    %373 = vsyncpa [#allocation3], 1
    %s374 = scalar_lea.sflag [#allocation3], 1
    %375 = vsyncpa %s374, 1
    %376 = vsyncpa [#allocation6], 1
    %377 = vsyncpa [#allocation4], 1
    %s378 = scalar_lea.sflag [#allocation4], 1
    %379 = vsyncpa %s378, 1

</llo_original>
